<compile_context>
chip_gen: v7x
topology: tpu7x:2x2x1
jax: 0.10.0
libtpu: 0.0.40
codegen_flags: <defaults>
</compile_context>

<pallas_src>
import math
import jax
import jax.numpy as jnp
from jax.experimental import pallas as pl
from jax.experimental.pallas import tpu as pltpu


def dim_of_Rs(Rs):
    """dim of a representation list [(multiplicity, l), ...]."""
    return sum(mul * (2 * l + 1) for mul, l in Rs)


GAMMA = 4.0  # RBF width


def _round_up(x, m):
    return ((x + m - 1) // m) * m


def _group_kernel_body(r_ref, centers_ref, w_ref, out_ref):
    # r_ref:       (tn, 3)    relative positions for this N-tile
    # centers_ref: (1, B)     RBF centers (same block every step)
    # w_ref:       (B, tdp)   column slice of the fused group-minor weight slab
    # out_ref:     (tn, tdp)  lane-dense output tile
    r = r_ref[...]                                   # (tn, 3)
    rx = r[:, 0:1]
    ry = r[:, 1:2]
    rz = r[:, 2:3]
    # Squared norm via explicit lane slices: pure VPU, no XLU cross-lane reduce.
    d = jnp.sqrt(rx * rx + ry * ry + rz * rz)        # (tn, 1)
    feat = jnp.exp(-GAMMA * (d - centers_ref[...]) ** 2)   # (tn, B)  EUP work
    acc = jnp.dot(feat, w_ref[...],
                  preferred_element_type=jnp.float32)       # (tn, tdp) MXU, f32 acc
    out_ref[...] = acc.astype(out_ref.dtype)


def fold_group_weights(weights, d_pad):
    """One-time fold of per-group weights (G,B,D) into a group-minor,
    lane-padded slab (B, d_pad).  Cache the result across calls."""
    G, B, D = weights.shape
    d_total = G * D
    w = jnp.transpose(weights, (1, 0, 2)).reshape(B, d_total)
    if d_pad != d_total:
        w = jnp.pad(w, ((0, 0), (0, d_pad - d_total)))
    return w


def plan_tiles(N, d_total, tn=512, tdp=1024):
    """Pick aligned tile sizes and padded extents."""
    # column tile: multiple of 256 (v6e/v7x MXU width; lane-dense everywhere)
    tdp = max(256, _round_up(min(tdp, _round_up(d_total, 256)), 256))
    d_pad = _round_up(d_total, tdp)
    # row tile: multiple of 8 sublanes
    tn = max(8, _round_up(min(tn, _round_up(N, 8)), 8))
    n_pad = _round_up(max(N, 1), tn)
    return tn, n_pad, tdp, d_pad


def group_kernel_forward(r, centers, weights, dim_out, dim_in, *,
                         tn=512, tdp=1024, out_dtype=jnp.float32,
                         w_fused=None):
    """Pallas GroupKernel forward.

    Returns [N, groups, dim_out, dim_in] (torch.stack(..., dim=-3) convention).
    Pass a cached `w_fused = fold_group_weights(weights, d_pad)` to skip the
    per-call weight fold.
    """
    N = r.shape[0]
    G, B, D = weights.shape
    assert D == dim_out * dim_in
    d_total = G * D

    tn, n_pad, tdp, d_pad = plan_tiles(N, d_total, tn=tn, tdp=tdp)
    n_tiles = n_pad // tn
    d_tiles = d_pad // tdp

    if w_fused is None:
        w_fused = fold_group_weights(weights, d_pad)
    assert w_fused.shape == (B, d_pad)

    r_p = jnp.pad(r, ((0, n_pad - N), (0, 0))) if n_pad != N else r

    # VMEM budget: double-buffered output tile + weight column slice + lane-
    # padded r tile + headroom.  Capped at 48 MiB so the pipeline fits v7x's
    # 64 MiB VMEM; the max() clears v5e's 16 MiB scoped default.
    out_itemsize = jnp.dtype(out_dtype).itemsize
    vmem_bytes = (2 * tn * tdp * out_itemsize      # output double buffer
                  + 2 * B * tdp * 4                # fused weight column slice
                  + 2 * tn * 128 * 4               # (tn,3) r block, lane-padded
                  + (4 << 20))                     # centers + slack
    vmem_bytes = int(min(max(vmem_bytes, 16 << 20), 48 << 20))

    out = pl.pallas_call(
        _group_kernel_body,
        out_shape=jax.ShapeDtypeStruct((n_pad, d_pad), out_dtype),
        grid_spec=pltpu.PrefetchScalarGridSpec(
            num_scalar_prefetch=0,
            grid=(n_tiles, d_tiles),               # d inner: weights re-DMA'd
            in_specs=[                             #   only ~B/tn of out traffic
                pl.BlockSpec((tn, 3), lambda i, j: (i, 0)),     # r tile
                pl.BlockSpec((1, B), lambda i, j: (0, 0)),      # centers (shared)
                pl.BlockSpec((B, tdp), lambda i, j: (0, j)),    # weight columns
            ],
            out_specs=pl.BlockSpec((tn, tdp), lambda i, j: (i, j)),
        ),
        compiler_params=pltpu.CompilerParams(
            # every (i, j) tile is independent -> both axes parallel
            # (shards across v7x's 2 TensorCores; neutral on v5e/v6e)
            dimension_semantics=("parallel", "parallel"),
            vmem_limit_bytes=vmem_bytes),
    )(r_p, centers, w_fused)

    if n_pad != N or d_pad != d_total:
        out = out[:N, :d_total]
    # (N, G*D) -> (N, G, dim_out, dim_in): pure reshape, no transpose.
    return out.reshape(N, G, dim_out, dim_in)


def _reference(r, centers, weights, dim_out, dim_in):
    """Plain-JAX reference for the same computation."""
    d = jnp.linalg.norm(r, axis=-1, keepdims=True)                # (N, 1)
    feat = jnp.exp(-GAMMA * (d - centers) ** 2)                   # (N, B)
    out = jnp.einsum('nb,gbd->ngd', feat, weights)                # (N, G, D)
    N, G, _ = out.shape
    return out.reshape(N, G, dim_out, dim_in)


if __name__ == "__main__":
    # Small, deterministic setup consistent with GroupKernel(Rs_in, Rs_out, kernel, groups)
    Rs_in = [(2, 0), (1, 1)]     # dim_in  = 2*1 + 1*3 = 5
    Rs_out = [(2, 0), (2, 1)]    # dim_out = 2*1 + 2*3 = 8
    groups = 3
    N = 16                       # number of relative-position vectors (edges)
    B = 8                        # number of radial basis functions

    dim_in = dim_of_Rs(Rs_in)
    dim_out = dim_of_Rs(Rs_out)
    D = dim_out * dim_in
    d_total = groups * D

    key = jax.random.PRNGKey(0)
    k_r, k_w = jax.random.split(key)

    r = jax.random.normal(k_r, (N, 3), dtype=jnp.float32)
    centers = jnp.linspace(0.0, 2.0, B, dtype=jnp.float32).reshape(1, B)
    # One weight slab per group, deterministic normal init (e3nn-style scaling).
    weights = jax.random.normal(k_w, (groups, B, D), dtype=jnp.float32) / math.sqrt(B * dim_in)

    # Hoist the weight fold out of the call path (cacheable across calls).
    _, _, _, d_pad = plan_tiles(N, d_total)
    w_fused = fold_group_weights(weights, d_pad)
    w_fused = jax.block_until_ready(w_fused)

    out = group_kernel_forward(r, centers, weights, dim_out, dim_in,
                               w_fused=w_fused)
    out = jax.block_until_ready(out)

    assert out.shape == (N, groups, dim_out, dim_in), out.shape

    ref = _reference(r, centers, weights, dim_out, dim_in)
    if not jnp.allclose(out, ref, atol=1e-5, rtol=1e-5):
        raise AssertionError("Pallas GroupKernel does not match reference")

    # TODO(synk): if this kernel is ever differentiated, mask the zero-padded
    # rows (n_pad > N) before reducing into weight gradients; d = |r| also has
    # a NaN gradient at r = 0 (same as the plain-JAX reference).
    print("KERNEL_OK")
</pallas_src>

<mosaic_0001>
module attributes {stable_mosaic.version = 11 : i64} {
  func.func @_group_kernel_body(%arg0: i32, %arg1: i32, %arg2: memref<16x3xf32, #tpu.memory_space<vmem>>, %arg3: memref<1x8xf32, #tpu.memory_space<vmem>>, %arg4: memref<8x256xf32, #tpu.memory_space<vmem>>, %arg5: memref<16x256xf32, #tpu.memory_space<vmem>>) attributes {dimension_semantics = [#tpu.dimension_semantics<parallel>, #tpu.dimension_semantics<parallel>], iteration_bounds = array<i64: 1, 1>, scalar_prefetch = 0 : i64, scratch_operands = 0 : i64, tpu.core_type = #tpu.core_type<tc>, window_params = [{transform_indices = @transform_0, window_bounds = array<i64: 16, 3>}, {pipeline_mode = #tpu.pipeline_mode<synchronous>, transform_indices = @transform_1, window_bounds = array<i64: 1, 8>}, {transform_indices = @transform_2, window_bounds = array<i64: 8, 256>}, {transform_indices = @transform_3, window_bounds = array<i64: 16, 256>}]} {
    %c0 = arith.constant 0 : index
    %c0_0 = arith.constant 0 : index
    %0 = vector.load %arg2[%c0, %c0_0] : memref<16x3xf32, #tpu.memory_space<vmem>>, vector<16x3xf32>
    %1 = vector.extract_strided_slice %0 {offsets = [0, 0], sizes = [16, 1], strides = [1, 1]} : vector<16x3xf32> to vector<16x1xf32>
    %2 = vector.extract_strided_slice %0 {offsets = [0, 1], sizes = [16, 1], strides = [1, 1]} : vector<16x3xf32> to vector<16x1xf32>
    %3 = vector.extract_strided_slice %0 {offsets = [0, 2], sizes = [16, 1], strides = [1, 1]} : vector<16x3xf32> to vector<16x1xf32>
    %4 = arith.mulf %1, %1 : vector<16x1xf32>
    %5 = arith.mulf %2, %2 : vector<16x1xf32>
    %6 = arith.addf %4, %5 : vector<16x1xf32>
    %7 = arith.mulf %3, %3 : vector<16x1xf32>
    %8 = arith.addf %6, %7 : vector<16x1xf32>
    %9 = math.sqrt %8 : vector<16x1xf32>
    %c0_1 = arith.constant 0 : index
    %c0_2 = arith.constant 0 : index
    %10 = vector.load %arg3[%c0_1, %c0_2] : memref<1x8xf32, #tpu.memory_space<vmem>>, vector<1x8xf32>
    %11 = vector.broadcast %9 : vector<16x1xf32> to vector<16x8xf32>
    %12 = vector.broadcast %10 : vector<1x8xf32> to vector<16x8xf32>
    %13 = arith.subf %11, %12 : vector<16x8xf32>
    %14 = arith.mulf %13, %13 : vector<16x8xf32>
    %cst = arith.constant -4.000000e+00 : f32
    %15 = vector.broadcast %cst : f32 to vector<16x8xf32>
    %16 = arith.mulf %15, %14 : vector<16x8xf32>
    %17 = math.exp %16 : vector<16x8xf32>
    %c0_3 = arith.constant 0 : index
    %c0_4 = arith.constant 0 : index
    %18 = vector.load %arg4[%c0_3, %c0_4] : memref<8x256xf32, #tpu.memory_space<vmem>>, vector<8x256xf32>
    %cst_5 = arith.constant dense<0.000000e+00> : vector<16x256xf32>
    %19 = tpu.matmul %17, %18, %cst_5 {dimension_numbers = #tpu.dot_dimension_numbers<[1], [0], [0], [1], [0, 0, 1, 1], [], []>} : vector<16x8xf32>, vector<8x256xf32>, vector<16x256xf32> -> vector<16x256xf32>
    %c0_6 = arith.constant 0 : index
    %c0_7 = arith.constant 0 : index
    %20 = vector.load %arg5[%c0_6, %c0_7] : memref<16x256xf32, #tpu.memory_space<vmem>>, vector<16x256xf32>
    tpu.vector_store %arg5[%c0_6, %c0_7], %19 {strides = array<i32>} : memref<16x256xf32, #tpu.memory_space<vmem>>, vector<16x256xf32>,
    return
  }
  func.func @transform_0(%arg0: i32, %arg1: i32) -> (i32, i32) {
    %c0_i32 = arith.constant 0 : i32
    %c0_i32_0 = arith.constant 0 : i32
    return %arg0, %c0_i32 : i32, i32
  }
  func.func @transform_1(%arg0: i32, %arg1: i32) -> (i32, i32) {
    %c0_i32 = arith.constant 0 : i32
    %c0_i32_0 = arith.constant 0 : i32
    %c0_i32_1 = arith.constant 0 : i32
    return %c0_i32, %c0_i32_0 : i32, i32
  }
  func.func @transform_2(%arg0: i32, %arg1: i32) -> (i32, i32) {
    %c0_i32 = arith.constant 0 : i32
    %c0_i32_0 = arith.constant 0 : i32
    return %c0_i32, %arg1 : i32, i32
  }
  func.func @transform_3(%arg0: i32, %arg1: i32) -> (i32, i32) {
    %c0_i32 = arith.constant 0 : i32
    return %arg0, %arg1 : i32, i32
  }
}

</mosaic_0001>

<llo_original>
// kernel: tpu_custom_call.1
$region0: #{tpu_custom_call.1}
  #allocation0 [shape = 'u32[]', space=smem, size = 0x4, offset = 0x4, fixed_abs, tag = 'smem constant byte address 0x4 - core index']
  #allocation1 [shape = 'u32[144,128]{1,0:T(1,128)}', space=vmem, size = 0x12000, scoped, tag = 'internal scratch']
  %s0 = inlined_call_operand.vmem [shape: f32[16,3], index: 0, kind: input, shape index: {}]
  %s1 = inlined_call_operand.vmem [shape: f32[1,8], index: 1, kind: input, shape index: {}]
  %s2 = inlined_call_operand.vmem [shape: f32[8,256], index: 2, kind: input, shape index: {}]
  %s3 = inlined_call_operand.hbm [shape: f32[16,256], index: 3, kind: output, shape index: {}]
  %s4 = sld [smem:[#allocation0]]
  $region22: #{tpu_custom_call.1} parent=0
    _
  %s6 = ssub.s32 1, %s4
  %s7 = scalar_select 0, %s6, %s4
  $region1: #{tpu_custom_call.1} parent=0
    #allocation2 [shape = 'u8[16384]{0}', space=vmem, size = 0x4000, scoped, tag = 'output window, operand 0, single buffered']
    #allocation3 [shape = 's32[1]{0}', space=sflag, size = 0x4, scoped, tag = 'scoped memory for tpu_custom_call.1']
    %8 = vsyncpa [#allocation3], 0
    // Predicated region
    $region2: #{tpu_custom_call.1} parent=1 // pred_check
      _
    $region3: #{tpu_custom_call.1} parent=1 // pred_check_branch
      %10 = sbr.rel (0) target = $region5
    $region4: #{tpu_custom_call.1} parent=1 // pred_region
      _
    $region5: #{tpu_custom_call.1} parent=1 // pred_fallthru
      _
    // Predicated region
    $region6: #{tpu_custom_call.1} parent=1 // pred_check
      _
    $region7: #{tpu_custom_call.1} parent=1 // pred_check_branch
      %12 = sbr.rel (0) target = $region9
    $region8: #{tpu_custom_call.1} parent=1 // pred_region
      _
    $region9: #{tpu_custom_call.1} parent=1 // pred_fallthru
      _
    // Predicated region
    $region10: #{tpu_custom_call.1} parent=1 // pred_check
      _
    $region11: #{tpu_custom_call.1} parent=1 // pred_check_branch
      %14 = sbr.rel (0) target = $region13
    $region12: #{tpu_custom_call.1} parent=1 // pred_region
      _
    $region13: #{tpu_custom_call.1} parent=1 // pred_fallthru
      _
    %v15 = vld [vmem:[%s0] sm:$0xff]
    %v16 = vld [vmem:[%s0 + $0x8] sm:$0xff]
    %v17 = vmul.f32 %v15, %v15
    %v18 = vmul.f32 %v16, %v16
    %21 = vrot.lane.b32.xlu0 %v17, 127
    %v22 = vpop.permute.xlu0 %21
    %23 = vrot.lane.b32.xlu0 %v18, 127
    %v24 = vpop.permute.xlu0 %23
    %v27 = vadd.f32 %v17, %v22
    %v28 = vadd.f32 %v18, %v24
    %29 = vrot.lane.b32.xlu0 %v17, 126
    %v30 = vpop.permute.xlu0 %29
    %31 = vrot.lane.b32.xlu0 %v18, 126
    %v32 = vpop.permute.xlu0 %31
    %v35 = vadd.f32 %v27, %v30
    %v36 = vadd.f32 %v28, %v32
    %v37 = vrsqrt.pop %v35
    %v38 = vmul.f32 %v35, %v37
    %vm39 = vcmp.eq.f32.partialorder %v35, inf
    %v40 = vsel %vm39, %v35, %v38
    %vm41 = vcmp.eq.f32.partialorder %v35, 0.0
    %v42 = vand.u32 %v35, 2147483648
    %v43 = vsel %vm41, %v42, %v40
    %v44 = vrsqrt.pop %v36
    %v45 = vmul.f32 %v36, %v44
    %vm46 = vcmp.eq.f32.partialorder %v36, inf
    %v47 = vsel %vm46, %v36, %v45
    %vm48 = vcmp.eq.f32.partialorder %v36, 0.0
    %v49 = vand.u32 %v36, 2147483648
    %v50 = vsel %vm48, %v49, %v47
    %v51 = vld [vmem:[%s1] sm:$0x1]
    %53 = vset.pattern.permute.xlu0 0
    %54 = vperm.xlu0 %53, %v43
    %v55 = vpop.permute.xlu0 %54
    %58 = vset.pattern.permute.xlu0 0
    %59 = vperm.xlu0 %58, %v50
    %v60 = vpop.permute.xlu0 %59
    %v63 = vlaneseq
    %v64 = vshrl.u32 %v63, 7
    %v65 = vsub.s32 0, %v64
    %v66 = vrot.slane %v51, %v65
    %v68 = vsub.f32 %v55, %v66
    %v69 = vsub.f32 %v60, %v66
    %v70 = vmul.f32 %v68, %v68
    %v71 = vmul.f32 %v69, %v69
    %v72 = vmul.f32 %v70, -4.0
    %v73 = vmul.f32 %v71, -4.0
    %v74 = vmul.f32 %v72, 1.442695
    %v75 = vpow.pop %v74
    %v76 = vmul.f32 %v73, 1.442695
    %v77 = vpow.pop %v76
    %v78 = vld [vmem:[%s2] sm:$0xff]
    %v79 = vld [vmem:[%s2 + $0x8] sm:$0xff]
    %vm80 = vcmask 64512
    %v82 = vsel %vm80, %v75, 0
    %v85 = vsel %vm80, %v77, 0
    %87 = vmatprep.subr.mxu0 %v79
    %88 = vmatpush1.msra.mxu0 %v78
    %89 = vmatprep.subr.mxu0 0.0
    %90 = vmatpush1.msra.mxu0 0.0
    %91 = vmatprep.subr.mxu0 0.0
    %92 = vmatpush1.msra.mxu0 0.0
    %93 = vmatprep.subr.mxu0 0.0
    %94 = vmatpush1.msra.mxu0 0.0
    %95 = vmatprep.subr.mxu0 0.0
    %96 = vmatpush1.msra.mxu0 0.0
    %97 = vmatprep.subr.mxu0 0.0
    %98 = vmatpush1.msra.mxu0 0.0
    %99 = vmatprep.subr.mxu0 0.0
    %100 = vmatpush1.msra.mxu0 0.0
    %101 = vmatprep.subr.mxu0 0.0
    %102 = vmatpush1.msra.mxu0 0.0
    %103 = vmatprep.subr.mxu0 0.0
    %104 = vmatpush1.msra.mxu0 0.0
    %105 = vmatprep.subr.mxu0 0.0
    %106 = vmatpush1.msra.mxu0 0.0
    %107 = vmatprep.subr.mxu0 0.0
    %108 = vmatpush1.msra.mxu0 0.0
    %109 = vmatprep.subr.mxu0 0.0
    %110 = vmatpush1.msra.mxu0 0.0
    %111 = vmatprep.subr.mxu0 0.0
    %112 = vmatpush1.msra.mxu0 0.0
    %113 = vmatprep.subr.mxu0 0.0
    %114 = vmatpush1.msra.mxu0 0.0
    %115 = vmatprep.subr.mxu0 0.0
    %116 = vmatpush1.msra.mxu0 0.0
    %117 = vmatprep.subr.mxu0 0.0
    %118 = vmatpush1.msra.mxu0 0.0
    %119 = vmatprep.subr.mxu0 0.0
    %120 = vmatpush1.msra.mxu0 0.0
    %121 = vmatprep.subr.mxu0 0.0
    %122 = vmatpush1.msra.mxu0 0.0
    %123 = vmatprep.subr.mxu0 0.0
    %124 = vmatpush1.msra.mxu0 0.0
    %125 = vmatprep.subr.mxu0 0.0
    %126 = vmatpush1.msra.mxu0 0.0
    %127 = vmatprep.subr.mxu0 0.0
    %128 = vmatpush1.msra.mxu0 0.0
    %129 = vmatprep.subr.mxu0 0.0
    %130 = vmatpush1.msra.mxu0 0.0
    %131 = vmatprep.subr.mxu0 0.0
    %132 = vmatpush1.msra.mxu0 0.0
    %133 = vmatprep.subr.mxu0 0.0
    %134 = vmatpush1.msra.mxu0 0.0
    %135 = vmatprep.subr.mxu0 0.0
    %136 = vmatpush1.msra.mxu0 0.0
    %137 = vmatprep.subr.mxu0 0.0
    %138 = vmatpush1.msra.mxu0 0.0
    %139 = vmatprep.subr.mxu0 0.0
    %140 = vmatpush1.msra.mxu0 0.0
    %141 = vmatprep.subr.mxu0 0.0
    %142 = vmatpush1.msra.mxu0 0.0
    %143 = vmatprep.subr.mxu0 0.0
    %144 = vmatpush1.msra.mxu0 0.0
    %145 = vmatprep.subr.mxu0 0.0
    %146 = vmatpush1.msra.mxu0 0.0
    %147 = vmatprep.subr.mxu0 0.0
    %148 = vmatpush1.msra.mxu0 0.0
    %149 = vmatprep.subr.mxu0 0.0
    %150 = vmatpush1.msra.mxu0 0.0
    %151 = vmatprep.mubr.f32.mxu0 0.0
    %152 = vmatmul.mubr.f32.gmra.mrb[0].mxu0 %v82
    %v153 = vpop.f32.mrb[0].mxu0
    %v154 = vadd.f32 0.0, %v153
    %v155 = vpop.f32.mrb[0].mxu0
    %v156 = vadd.f32 0.0, %v155
    %157 = vmatprep.mubr.f32.mxu0 0.0
    %158 = vmatmul.mubr.f32.gmra.mrb[0].mxu0 %v85
    %v159 = vpop.f32.mrb[0].mxu0
    %v160 = vadd.f32 0.0, %v159
    %v161 = vpop.f32.mrb[0].mxu0
    %v162 = vadd.f32 0.0, %v161
    %163 = vdwg.mxu0
    %164 = vst [vmem:[#allocation2] sm:$0xff] %v154
    %165 = vst [vmem:[#allocation2 + $0x8] sm:$0xff] %v156
    %166 = vst [vmem:[#allocation2 + $0x10] sm:$0xff] %v160
    %167 = vst [vmem:[#allocation2 + $0x18] sm:$0xff] %v162
    // Predicated region
    $region14: #{tpu_custom_call.1} parent=1 // pred_check
      _
    $region15: #{tpu_custom_call.1} parent=1 // pred_check_branch
      %169 = sbr.rel (0) target = $region17
    $region16: #{tpu_custom_call.1} parent=1 // pred_region
      %s171 = ssub.s32 512, 512
      %172 = vsyncadd [#allocation3], %s171
      %s173 = sshll.u32 [#allocation2], 4
      %s174 = int_to_ptr.vmem [resolvable:$true] %s173
      %179 = dma.vmem_to_hbm [thread:$0]  %s174, 512, %s3, [#allocation3], 256, 256, 16
    $region17: #{tpu_custom_call.1} parent=1 // pred_fallthru
      _
    // Predicated region
    $region18: #{tpu_custom_call.1} parent=1 // pred_check
      _
    $region19: #{tpu_custom_call.1} parent=1 // pred_check_branch
      %181 = sbr.rel (0) target = $region21
    $region20: #{tpu_custom_call.1} parent=1 // pred_region
      %182 = dma.done [#allocation3], 512
    $region21: #{tpu_custom_call.1} parent=1 // pred_fallthru
      _
    %183 = vsyncpa [#allocation3], 1

</llo_original>
